<compile_context>
chip_gen: v5e
topology: v5e:2x2
jax: 0.10.0
libtpu: 0.0.40
codegen_flags: <defaults>
</compile_context>

<pallas_src>
import math

import jax
import jax.numpy as jnp
from jax.experimental import pallas as pl
from jax.experimental.pallas import tpu as pltpu


def _round_up(x: int, m: int) -> int:
    return ((x + m - 1) // m) * m


def _l2dst_kernel(x_ref, w1_ref, b1_ref, w2_ref, b2_ref, o_ref):
    # x_ref : (Bt*S, D)     flattened (batch, seq) rows of this batch block
    # w1_ref: (D, Ht)       first-projection weight tile ((D_in, H) layout)
    # b1_ref: (1, Ht)       f32
    # w2_ref: (Op, S)       second-projection weight (original (O, S) layout, zero-padded)
    # b2_ref: (Op, 1)       f32
    # o_ref : (Bt, Op, Ht)  output block, lane-dense along Ht
    Bt, Op, Ht = o_ref.shape
    S = w2_ref.shape[1]

    x = x_ref[...]
    # ---- first projection + tanh: all Bt*S rows stream through the MXU at once ----
    h = jnp.tanh(
        jnp.dot(x, w1_ref[...], preferred_element_type=jnp.float32) + b1_ref[...]
    )                                     # (Bt*S, Ht), f32 elementwise math (v5e-safe)
    h = h.astype(x.dtype)                 # bf16 inputs -> bf16 MXU operands for 2nd matmul
    h3 = h.reshape(Bt, S, Ht)             # free relayout when S % 8 == 0

    # ---- second (transposed) projection, directly in (Op, Ht) orientation ----
    #   y[b, o, j] = sum_s W2[o, s] * h[b, s, j]
    # lhs (Bt, Op, S) with K minor, rhs (Bt, S, Ht) with N minor: standard MXU layout;
    # the result tile is already lane-dense along Ht -> direct unmasked store, no transpose.
    w2b = jnp.broadcast_to(w2_ref[...][None], (Bt, Op, S))
    y = jax.lax.dot_general(
        w2b, h3,
        dimension_numbers=(((2,), (1,)), ((0,), (0,))),
        preferred_element_type=jnp.float32,
    )                                     # (Bt, Op, Ht), f32
    y = jnp.tanh(y + b2_ref[...][None])   # (Op, 1) column bias: cheap lane broadcast
    o_ref[...] = y.astype(o_ref.dtype)


@jax.jit
def l2dst_forward(x, w1, b1, w2, b2):
    """x: (B, S, D); w1: (D, H); b1: (H,); w2: (O, S); b2: (O,).  Returns (B, O, H)."""
    B, S, D = x.shape
    H = w1.shape[1]
    O = w2.shape[0]
    cdt = x.dtype                          # MXU operand dtype follows the input
    isz = jnp.dtype(cdt).itemsize
    row_mult = 8 * max(1, 4 // isz)        # sublane packing: 8 f32, 16 bf16, 32 int8/fp8

    # --- output padding: H lane-dense, O sublane-packed for the store tile ---
    H_pad = _round_up(H, 128)
    O_pad = _round_up(O, row_mult)

    # --- VMEM budget (generation-aware, headroom left for compiler scratch) ---
    try:
        vmem_cap = int(pltpu.get_tpu_info().vmem_capacity_bytes)
    except Exception:
        vmem_cap = 64 * 2**20              # conservative fallback (v7x per-TensorCore)
    budget = (vmem_cap * 3) // 4           # ~48 MiB on v7x, ~96 MiB on v5e/v6e

    # --- batch-block size: fill the MXU M dim, keep the flattened block sublane-aligned ---
    m = row_mult // math.gcd(S, row_mult)          # block_b must be a multiple of this
    target = _round_up(max(1, -(-256 // S)), m)    # want block_b * S >= 256
    block_b = min(target, _round_up(B, m))

    S_lane = _round_up(S, 128)

    def step_bytes(bb, bh):
        # Double-buffered pipeline blocks + in-kernel f32 intermediates (upper bound).
        blocks = 2 * (bb * S * D * isz             # x block
                      + D * bh * isz               # w1 tile
                      + bh * 4                     # b1 tile
                      + O_pad * S_lane * isz       # w2
                      + O_pad * 128 * 4            # b2
                      + bb * O_pad * bh * isz)     # output block
        interm = (bb * S * bh * (4 + isz)          # h (f32) + cast copy
                  + bb * O_pad * bh * 4            # y (f32)
                  + bb * O_pad * S_lane * isz)     # broadcast W2
        return blocks + interm

    # --- H-block size: largest 128-multiple divisor of H_pad that fits the budget ---
    n128 = H_pad // 128
    block_h = 128
    for d in sorted((d for d in range(1, n128 + 1) if n128 % d == 0), reverse=True):
        if step_bytes(block_b, 128 * d) <= budget:
            block_h = 128 * d
            break
    while block_b > m and step_bytes(block_b, block_h) > budget:
        block_b = max(m, _round_up(block_b // 2, m))

    B_pad = _round_up(B, block_b)

    # --- guarantee >= 2 grid steps on a "parallel" axis when possible (v7x: 2 TCs) ---
    if B_pad // block_b == 1 and H_pad // block_h == 1:
        if n128 >= 2:
            k = 2
            while n128 % k != 0:
                k += 1
            block_h = H_pad // k
        else:
            half = max(m, _round_up(block_b // 2, m))
            if half < block_b:
                block_b = half
                B_pad = _round_up(B, block_b)

    num_b = B_pad // block_b
    num_h = H_pad // block_h

    # --- parameter / input padding & layout (plain JAX, outside the kernel) ---
    w1_p = jnp.pad(w1.astype(cdt), ((0, 0), (0, H_pad - H)))                  # (D, H_pad)
    b1_p = jnp.pad(b1.astype(jnp.float32), (0, H_pad - H)).reshape(1, H_pad)
    w2_p = jnp.pad(w2.astype(cdt), ((0, O_pad - O), (0, 0)))                  # (O_pad, S)
    b2_p = jnp.pad(b2.astype(jnp.float32), (0, O_pad - O)).reshape(O_pad, 1)
    x_flat = jnp.pad(x, ((0, B_pad - B), (0, 0), (0, 0))).reshape(B_pad * S, D)

    # --- grid-axis order: re-stream the cheaper of {X, W1} from HBM ---
    x_bytes = B_pad * S * D * isz
    w1_bytes = D * H_pad * isz
    h_outer = w1_bytes * (num_b - 1) > x_bytes * (num_h - 1)
    if h_outer:          # W1 tile held across the inner (batch) loop; fetched once total
        grid = (num_h, num_b)
        x_map = lambda hi, bi: (bi, 0)
        w1_map = lambda hi, bi: (0, hi)
        o_map = lambda hi, bi: (bi, 0, hi)
    else:                # X block held across the inner (H) loop; fetched once total
        grid = (num_b, num_h)
        x_map = lambda bi, hi: (bi, 0)
        w1_map = lambda bi, hi: (0, hi)
        o_map = lambda bi, hi: (bi, 0, hi)
    const_map = lambda i, j: (0, 0)

    cost = pl.CostEstimate(
        flops=2 * B_pad * S * D * H_pad + 2 * B_pad * O_pad * S * H_pad,
        transcendentals=B_pad * S * H_pad + B_pad * O_pad * H_pad,
        bytes_accessed=(x_flat.size * isz + w1_p.size * isz + 4 * b1_p.size
                        + w2_p.size * isz + 4 * b2_p.size
                        + B_pad * O_pad * H_pad * isz),
    )

    out = pl.pallas_call(
        _l2dst_kernel,
        out_shape=jax.ShapeDtypeStruct((B_pad, O_pad, H_pad), cdt),
        grid_spec=pltpu.PrefetchScalarGridSpec(
            num_scalar_prefetch=0,
            grid=grid,
            in_specs=[
                pl.BlockSpec((block_b * S, D), x_map),
                pl.BlockSpec((D, block_h), w1_map),
                pl.BlockSpec((1, block_h), w1_map),
                pl.BlockSpec((O_pad, S), const_map),
                pl.BlockSpec((O_pad, 1), const_map),
            ],
            out_specs=pl.BlockSpec((block_b, O_pad, block_h), o_map),
        ),
        compiler_params=pltpu.CompilerParams(
            dimension_semantics=("parallel", "parallel"),
            vmem_limit_bytes=int(budget),
        ),
        cost_estimate=cost,
    )(x_flat, w1_p, b1_p, w2_p, b2_p)

    if B_pad == B and O_pad == O and H_pad == H:
        return out                       # no padding -> skip the extra HBM read+write
    return out[:B, :O, :H]


def l2dst_reference(x, w1, b1, w2, b2):
    """Pure-JAX reference mirroring the PyTorch forward (dropout = identity)."""
    hp = jax.lax.Precision.HIGHEST
    h = jnp.tanh(jnp.einsum("bsd,dh->bsh", x, w1, precision=hp) + b1)   # (B, S, H)
    h_t = jnp.swapaxes(h, -1, -2)                                        # (B, H, S)
    y = jnp.tanh(jnp.einsum("bhs,os->bho", h_t, w2, precision=hp) + b2)  # (B, H, O)
    return jnp.swapaxes(y, -2, -1)                                       # (B, O, H)


if __name__ == "__main__":
    # Small shapes consistent with the module:
    #   X: (B, S, D_in); dense1: D_in -> H; dense2 (applied after transpose): S -> O.
    B, S, D_in = 2, 8, 32
    H = 32   # ffn_num_hiddens
    O = 16   # ffn_num_outputs

    key = jax.random.PRNGKey(0)
    kx, kw1, kb1, kw2, kb2 = jax.random.split(key, 5)

    x = jax.random.normal(kx, (B, S, D_in), dtype=jnp.float32)

    # Deterministic parameter init (uniform, PyTorch-Linear-like scale).
    lim1 = 1.0 / jnp.sqrt(D_in)
    w1 = jax.random.uniform(kw1, (D_in, H), jnp.float32, -lim1, lim1)
    b1 = jax.random.uniform(kb1, (H,), jnp.float32, -lim1, lim1)
    lim2 = 1.0 / jnp.sqrt(S)
    w2 = jax.random.uniform(kw2, (O, S), jnp.float32, -lim2, lim2)
    b2 = jax.random.uniform(kb2, (O,), jnp.float32, -lim2, lim2)

    # TODO(synk): nn.Dropout(p=0.1) is treated as identity (eval-mode forward);
    # training-mode RNG dropout is not implemented in the kernel.

    out = jax.block_until_ready(l2dst_forward(x, w1, b1, w2, b2))
    ref = l2dst_reference(x, w1, b1, w2, b2)

    assert out.shape == (B, O, H), out.shape
    max_err = float(jnp.max(jnp.abs(out - ref)))
    assert jnp.allclose(out, ref, atol=1e-4, rtol=1e-4), max_err
    print("KERNEL_OK")
</pallas_src>

<mosaic_0001>
module attributes {stable_mosaic.version = 11 : i64} {
  func.func @_l2dst_kernel(%arg0: i32, %arg1: i32, %arg2: memref<8x32xf32, #tpu.memory_space<vmem>>, %arg3: memref<32x128xf32, #tpu.memory_space<vmem>>, %arg4: memref<1x128xf32, #tpu.memory_space<vmem>>, %arg5: memref<16x8xf32, #tpu.memory_space<vmem>>, %arg6: memref<16x1xf32, #tpu.memory_space<vmem>>, %arg7: memref<1x16x128xf32, #tpu.memory_space<vmem>>) attributes {dimension_semantics = [#tpu.dimension_semantics<parallel>, #tpu.dimension_semantics<parallel>], iteration_bounds = array<i64: 1, 2>, scalar_prefetch = 0 : i64, scratch_operands = 0 : i64, tpu.core_type = #tpu.core_type<tc>, window_params = [{transform_indices = @transform_0, window_bounds = array<i64: 8, 32>}, {transform_indices = @transform_1, window_bounds = array<i64: 32, 128>}, {transform_indices = @transform_2, window_bounds = array<i64: 1, 128>}, {pipeline_mode = #tpu.pipeline_mode<synchronous>, transform_indices = @transform_3, window_bounds = array<i64: 16, 8>}, {pipeline_mode = #tpu.pipeline_mode<synchronous>, transform_indices = @transform_4, window_bounds = array<i64: 16, 1>}, {transform_indices = @transform_5, window_bounds = array<i64: 1, 16, 128>}]} {
    %c0 = arith.constant 0 : index
    %c0_0 = arith.constant 0 : index
    %0 = vector.load %arg2[%c0, %c0_0] : memref<8x32xf32, #tpu.memory_space<vmem>>, vector<8x32xf32>
    %c0_1 = arith.constant 0 : index
    %c0_2 = arith.constant 0 : index
    %1 = vector.load %arg3[%c0_1, %c0_2] : memref<32x128xf32, #tpu.memory_space<vmem>>, vector<32x128xf32>
    %cst = arith.constant dense<0.000000e+00> : vector<8x128xf32>
    %2 = tpu.matmul %0, %1, %cst {dimension_numbers = #tpu.dot_dimension_numbers<[1], [0], [0], [1], [0, 0, 1, 1], [], []>} : vector<8x32xf32>, vector<32x128xf32>, vector<8x128xf32> -> vector<8x128xf32>
    %c0_3 = arith.constant 0 : index
    %c0_4 = arith.constant 0 : index
    %3 = vector.load %arg4[%c0_3, %c0_4] : memref<1x128xf32, #tpu.memory_space<vmem>>, vector<1x128xf32>
    %4 = vector.broadcast %3 : vector<1x128xf32> to vector<8x128xf32>
    %5 = arith.addf %2, %4 : vector<8x128xf32>
    %6 = math.tanh %5 : vector<8x128xf32>
    %7 = vector.shape_cast %6 : vector<8x128xf32> to vector<1x8x128xf32>
    %c0_5 = arith.constant 0 : index
    %c0_6 = arith.constant 0 : index
    %8 = vector.load %arg5[%c0_5, %c0_6] : memref<16x8xf32, #tpu.memory_space<vmem>>, vector<16x8xf32>
    %9 = vector.shape_cast %8 : vector<16x8xf32> to vector<1x16x8xf32>
    %cst_7 = arith.constant dense<0.000000e+00> : vector<1x16x128xf32>
    %10 = tpu.matmul %9, %7, %cst_7 {dimension_numbers = #tpu.dot_dimension_numbers<[2], [1], [1], [2], [0, 0, 0, 1, 1, 2], [0], [0]>} : vector<1x16x8xf32>, vector<1x8x128xf32>, vector<1x16x128xf32> -> vector<1x16x128xf32>
    %c0_8 = arith.constant 0 : index
    %c0_9 = arith.constant 0 : index
    %11 = vector.load %arg6[%c0_8, %c0_9] : memref<16x1xf32, #tpu.memory_space<vmem>>, vector<16x1xf32>
    %12 = vector.shape_cast %11 : vector<16x1xf32> to vector<1x16x1xf32>
    %13 = vector.broadcast %12 : vector<1x16x1xf32> to vector<1x16x128xf32>
    %14 = arith.addf %10, %13 : vector<1x16x128xf32>
    %15 = math.tanh %14 : vector<1x16x128xf32>
    %c0_10 = arith.constant 0 : index
    %c0_11 = arith.constant 0 : index
    %c0_12 = arith.constant 0 : index
    %16 = vector.load %arg7[%c0_10, %c0_11, %c0_12] : memref<1x16x128xf32, #tpu.memory_space<vmem>>, vector<1x16x128xf32>
    tpu.vector_store %arg7[%c0_10, %c0_11, %c0_12], %15 {strides = array<i32>} : memref<1x16x128xf32, #tpu.memory_space<vmem>>, vector<1x16x128xf32>,
    return
  }
  func.func @transform_0(%arg0: i32, %arg1: i32) -> (i32, i32) {
    %c0_i32 = arith.constant 0 : i32
    %c0_i32_0 = arith.constant 0 : i32
    return %arg1, %c0_i32 : i32, i32
  }
  func.func @transform_1(%arg0: i32, %arg1: i32) -> (i32, i32) {
    %c0_i32 = arith.constant 0 : i32
    %c0_i32_0 = arith.constant 0 : i32
    return %c0_i32, %arg0 : i32, i32
  }
  func.func @transform_2(%arg0: i32, %arg1: i32) -> (i32, i32) {
    %c0_i32 = arith.constant 0 : i32
    %c0_i32_0 = arith.constant 0 : i32
    return %c0_i32, %arg0 : i32, i32
  }
  func.func @transform_3(%arg0: i32, %arg1: i32) -> (i32, i32) {
    %c0_i32 = arith.constant 0 : i32
    %c0_i32_0 = arith.constant 0 : i32
    %c0_i32_1 = arith.constant 0 : i32
    return %c0_i32, %c0_i32_0 : i32, i32
  }
  func.func @transform_4(%arg0: i32, %arg1: i32) -> (i32, i32) {
    %c0_i32 = arith.constant 0 : i32
    %c0_i32_0 = arith.constant 0 : i32
    %c0_i32_1 = arith.constant 0 : i32
    return %c0_i32, %c0_i32_0 : i32, i32
  }
  func.func @transform_5(%arg0: i32, %arg1: i32) -> (i32, i32, i32) {
    %c0_i32 = arith.constant 0 : i32
    %c0_i32_0 = arith.constant 0 : i32
    return %arg1, %c0_i32, %arg0 : i32, i32, i32
  }
}

</mosaic_0001>

<llo_original>
// kernel: l2dst_forward.1
$region0: #{l2dst_forward.1}
  #allocation0 [shape = 'u32[]', space=smem, size = 0x4, offset = 0x4, fixed_abs, tag = 'smem constant byte address 0x4 - core index']
  #allocation1 [shape = 'u32[72,128]{1,0:T(1,128)}', space=vmem, size = 0x9000, scoped, tag = 'internal scratch']
  %s0 = inlined_call_operand.vmem [shape: f32[16,32], index: 0, kind: input, shape index: {}]
  %s1 = inlined_call_operand.vmem [shape: f32[32,128], index: 1, kind: input, shape index: {}]
  %s2 = inlined_call_operand.vmem [shape: f32[1,128], index: 2, kind: input, shape index: {}]
  %s3 = inlined_call_operand.vmem [shape: f32[16,8], index: 3, kind: input, shape index: {}]
  %s4 = inlined_call_operand.vmem [shape: f32[16,1], index: 4, kind: input, shape index: {}]
  %s5 = inlined_call_operand.hbm [shape: f32[2,16,128], index: 5, kind: output, shape index: {}]
  %s6 = sld [smem:[#allocation0]]
  $region53: #{l2dst_forward.1} parent=0
    _
  %s8 = ssub.s32 1, %s6
  %s9 = scalar_select 0, %s8, %s6
  $region1: #{l2dst_forward.1} parent=0
    #allocation2 [shape = 'u8[16384]{0}', space=vmem, size = 0x4000, scoped, tag = 'output window, operand 0']
    #allocation3 [shape = 's32[2]{0}', space=sflag, size = 0x8, scoped, tag = 'scoped memory for l2dst_forward.1']
    %10 = vsyncpa [#allocation3], 0
    %s11 = scalar_lea.sflag [#allocation3], 1
    %12 = vsyncpa %s11, 0
    loop: start=0, step=1, limit=4
    $region2: #{l2dst_forward.1} parent=1 // loop_pre_header
      _
    $region3: #{l2dst_forward.1} parent=1 // loop_header
      %s14 = sphi 0, %s18
      %p15 = scmp.ge.s32.totalorder %s14, 4
      %s21 = sphi 0, %s33
      %s22 = sphi 0, %s29
      %s23 = sphi 0, %s21
      %s24 = sphi 0, %s22
      %s25 = sphi 0, %s23
      %s26 = sphi 0, %s24
      %s36 = sphi 0, %s38
      %s39 = sphi 0, %s36
      %s40 = sphi 0, %s39
      %s56 = sphi 0, %s40
      %s62 = sphi 0, %s64
      %s65 = sphi 0, %s62
      %s66 = sphi 0, %s65
      %s82 = sphi 0, %s66
      %s88 = sphi 0, %s90
      %s91 = sphi 0, %s88
      %s92 = sphi 0, %s91
      %s108 = sphi 0, %s92
      %s112 = sphi 0, %s112
      %s114 = sphi 0, %s112
      %s115 = sphi 0, %s114
      %s129 = sphi 0, %s115
      %s133 = sphi 0, %s133
      %s135 = sphi 0, %s133
      %s136 = sphi 0, %s135
      %s150 = sphi 0, %s136
      %s158 = sphi 0, %s160
      %s161 = sphi 0, %s158
      %s162 = sphi 0, %s161
      %s178 = sphi 0, %s162
    $region4: #{l2dst_forward.1} parent=1 // loop_header_branch
      %17 = sbr.rel (%p15) target = $region8
    $region5: #{l2dst_forward.1} parent=1 // loop_body
      %s19 = ssub.s32 %s14, 1
      %s20 = ssub.s32 %s14, 2
      %s27 = sadd.s32 1, %s22
      %p28 = scmp.ge.s32.totalorder %s27, 2
      %s29 = scalar_select %p28, 0, %s27
      %s30 = sadd.s32 1, %s21
      %s31 = scalar_select %p28, %s30, %s21
      %p32 = scmp.ge.s32.totalorder %s31, 1
      %s33 = scalar_select %p32, 0, %s31
      %s34 = ssub.s32 %s22, %s29
      %p35 = scmp.eq.s32.totalorder %s34, 0
      %s37 = sadd.s32 %s36, 1
      %s38 = scalar_select %p35, %s36, %s37
      %p41 = pneg %p35
      %p42 = scmp.eq.s32.totalorder %s14, 1
      %p43 = por %p41, %p42
      %p44 = scmp.ne.s32.totalorder %s36, %s39
      %p45 = scmp.eq.s32.totalorder %s14, 0
      %p46 = por %p44, %p45
      %p47 = scmp.ne.s32.totalorder %s36, %s39
      %p48 = scmp.eq.s32.totalorder %s19, 1
      %p49 = por %p47, %p48
      %p50 = scmp.ne.s32.totalorder %s39, %s40
      %p51 = scmp.eq.s32.totalorder %s19, 0
      %p52 = por %p50, %p51
      %p53 = scmp.ne.s32.totalorder %s39, %s40
      %p54 = scmp.eq.s32.totalorder %s20, 1
      %p55 = por %p53, %p54
      %p57 = scmp.ne.s32.totalorder %s40, %s56
      %p58 = scmp.eq.s32.totalorder %s20, 0
      %p59 = por %p57, %p58
      %s60 = ssub.s32 %s21, %s33
      %p61 = scmp.eq.s32.totalorder %s60, 0
      %s63 = sadd.s32 %s62, 1
      %s64 = scalar_select %p61, %s62, %s63
      %p67 = pneg %p61
      %p68 = scmp.eq.s32.totalorder %s14, 1
      %p69 = por %p67, %p68
      %p70 = scmp.ne.s32.totalorder %s62, %s65
      %p71 = scmp.eq.s32.totalorder %s14, 0
      %p72 = por %p70, %p71
      %p73 = scmp.ne.s32.totalorder %s62, %s65
      %p74 = scmp.eq.s32.totalorder %s19, 1
      %p75 = por %p73, %p74
      %p76 = scmp.ne.s32.totalorder %s65, %s66
      %p77 = scmp.eq.s32.totalorder %s19, 0
      %p78 = por %p76, %p77
      %p79 = scmp.ne.s32.totalorder %s65, %s66
      %p80 = scmp.eq.s32.totalorder %s20, 1
      %p81 = por %p79, %p80
      %p83 = scmp.ne.s32.totalorder %s66, %s82
      %p84 = scmp.eq.s32.totalorder %s20, 0
      %p85 = por %p83, %p84
      %s86 = ssub.s32 %s21, %s33
      %p87 = scmp.eq.s32.totalorder %s86, 0
      %s89 = sadd.s32 %s88, 1
      %s90 = scalar_select %p87, %s88, %s89
      %p93 = pneg %p87
      %p94 = scmp.eq.s32.totalorder %s14, 1
      %p95 = por %p93, %p94
      %p96 = scmp.ne.s32.totalorder %s88, %s91
      %p97 = scmp.eq.s32.totalorder %s14, 0
      %p98 = por %p96, %p97
      %p99 = scmp.ne.s32.totalorder %s88, %s91
      %p100 = scmp.eq.s32.totalorder %s19, 1
      %p101 = por %p99, %p100
      %p102 = scmp.ne.s32.totalorder %s91, %s92
      %p103 = scmp.eq.s32.totalorder %s19, 0
      %p104 = por %p102, %p103
      %p105 = scmp.ne.s32.totalorder %s91, %s92
      %p106 = scmp.eq.s32.totalorder %s20, 1
      %p107 = por %p105, %p106
      %p109 = scmp.ne.s32.totalorder %s92, %s108
      %p110 = scmp.eq.s32.totalorder %s20, 0
      %p111 = por %p109, %p110
      %s113 = sadd.s32 %s112, 1
      %p116 = scmp.eq.s32.totalorder %s14, 1
      %p117 = scmp.ne.s32.totalorder %s112, %s114
      %p118 = scmp.eq.s32.totalorder %s14, 0
      %p119 = por %p117, %p118
      %p120 = scmp.ne.s32.totalorder %s112, %s114
      %p121 = scmp.eq.s32.totalorder %s19, 1
      %p122 = por %p120, %p121
      %p123 = scmp.ne.s32.totalorder %s114, %s115
      %p124 = scmp.eq.s32.totalorder %s19, 0
      %p125 = por %p123, %p124
      %p126 = scmp.ne.s32.totalorder %s114, %s115
      %p127 = scmp.eq.s32.totalorder %s20, 1
      %p128 = por %p126, %p127
      %p130 = scmp.ne.s32.totalorder %s115, %s129
      %p131 = scmp.eq.s32.totalorder %s20, 0
      %p132 = por %p130, %p131
      %s134 = sadd.s32 %s133, 1
      %p137 = scmp.eq.s32.totalorder %s14, 1
      %p138 = scmp.ne.s32.totalorder %s133, %s135
      %p139 = scmp.eq.s32.totalorder %s14, 0
      %p140 = por %p138, %p139
      %p141 = scmp.ne.s32.totalorder %s133, %s135
      %p142 = scmp.eq.s32.totalorder %s19, 1
      %p143 = por %p141, %p142
      %p144 = scmp.ne.s32.totalorder %s135, %s136
      %p145 = scmp.eq.s32.totalorder %s19, 0
      %p146 = por %p144, %p145
      %p147 = scmp.ne.s32.totalorder %s135, %s136
      %p148 = scmp.eq.s32.totalorder %s20, 1
      %p149 = por %p147, %p148
      %p151 = scmp.ne.s32.totalorder %s136, %s150
      %p152 = scmp.eq.s32.totalorder %s20, 0
      %p153 = por %p151, %p152
      %s154 = ssub.s32 %s22, %s29
      %s155 = ssub.s32 %s21, %s33
      %s156 = sor.u32 %s154, %s155
      %p157 = scmp.eq.s32.totalorder %s156, 0
      %s159 = sadd.s32 %s158, 1
      %s160 = scalar_select %p157, %s158, %s159
      %p163 = pneg %p157
      %p164 = scmp.eq.s32.totalorder %s14, 1
      %p165 = por %p163, %p164
      %p166 = scmp.ne.s32.totalorder %s158, %s161
      %p167 = scmp.eq.s32.totalorder %s14, 0
      %p168 = por %p166, %p167
      %p169 = scmp.ne.s32.totalorder %s158, %s161
      %p170 = scmp.eq.s32.totalorder %s19, 1
      %p171 = por %p169, %p170
      %p172 = scmp.ne.s32.totalorder %s161, %s162
      %p173 = scmp.eq.s32.totalorder %s19, 0
      %p174 = por %p172, %p173
      %p175 = scmp.ne.s32.totalorder %s161, %s162
      %p176 = scmp.eq.s32.totalorder %s20, 1
      %p177 = por %p175, %p176
      %p179 = scmp.ne.s32.totalorder %s162, %s178
      %p180 = scmp.eq.s32.totalorder %s20, 0
      %p181 = por %p179, %p180
      %p182 = scmp.le.s32.totalorder 1, %s14
      %p183 = scmp.lt.s32.totalorder %s14, 3
      %p184 = pnand %p182, %p183
      %p185 = pneg %p184
      // Predicated region
      $region9: #{l2dst_forward.1} parent=5 // pred_check
        _
      $region10: #{l2dst_forward.1} parent=5 // pred_check_branch
        %187 = sbr.rel (%p184) target = $region12
      $region11: #{l2dst_forward.1} parent=5 // pred_region
        %s188 = ssub.s32 %s14, 1
        // Predicated region
        $region13: #{l2dst_forward.1} parent=11 // pred_check
          %p189 = pneg %p78
        $region14: #{l2dst_forward.1} parent=11 // pred_check_branch
          %191 = sbr.rel (%p189) target = $region16
        $region15: #{l2dst_forward.1} parent=11 // pred_region
          %p192 = scmp.lt.s32.totalorder %s23, 0
          %s193 = scalar_select %p192, %s23, 0
          %s194 = smul.addr %s193, 8
          %s195 = scalar_lea.vmem %s1, %s194
        $region16: #{l2dst_forward.1} parent=11 // pred_fallthru
          _
        // Predicated region
        $region17: #{l2dst_forward.1} parent=11 // pred_check
          %p196 = pneg %p104
        $region18: #{l2dst_forward.1} parent=11 // pred_check_branch
          %198 = sbr.rel (%p196) target = $region20
        $region19: #{l2dst_forward.1} parent=11 // pred_region
          %p199 = scmp.lt.s32.totalorder %s23, 0
          %s200 = scalar_select %p199, %s23, 0
          %s201 = scalar_lea.vmem %s2, %s200
        $region20: #{l2dst_forward.1} parent=11 // pred_fallthru
          _
        // Predicated region
        $region21: #{l2dst_forward.1} parent=11 // pred_check
          %p202 = pneg %p125
        $region22: #{l2dst_forward.1} parent=11 // pred_check_branch
          %204 = sbr.rel (%p202) target = $region24
        $region23: #{l2dst_forward.1} parent=11 // pred_region
          _
        $region24: #{l2dst_forward.1} parent=11 // pred_fallthru
          _
        // Predicated region
        $region25: #{l2dst_forward.1} parent=11 // pred_check
          %p205 = pneg %p146
        $region26: #{l2dst_forward.1} parent=11 // pred_check_branch
          %207 = sbr.rel (%p205) target = $region28
        $region27: #{l2dst_forward.1} parent=11 // pred_region
          _
        $region28: #{l2dst_forward.1} parent=11 // pred_fallthru
          _
      $region12: #{l2dst_forward.1} parent=5 // pred_fallthru
        _
      %p208 = scmp.lt.s32.totalorder %s14, 2
      // Predicated region
      $region29: #{l2dst_forward.1} parent=5 // pred_check
        %p209 = pneg %p208
      $region30: #{l2dst_forward.1} parent=5 // pred_check_branch
        %211 = sbr.rel (%p209) target = $region32
      $region31: #{l2dst_forward.1} parent=5 // pred_region
        // Predicated region
        $region33: #{l2dst_forward.1} parent=31 // pred_check
          %p212 = pneg %p46
        $region34: #{l2dst_forward.1} parent=31 // pred_check_branch
          %214 = sbr.rel (%p212) target = $region36
        $region35: #{l2dst_forward.1} parent=31 // pred_region
          %p215 = scmp.lt.s32.totalorder %s22, 1
          %s216 = scalar_select %p215, %s22, 1
          %s217 = smul.addr %s216, 8
          %s218 = scalar_lea.vmem %s0, %s217
        $region36: #{l2dst_forward.1} parent=31 // pred_fallthru
          _
      $region32: #{l2dst_forward.1} parent=5 // pred_fallthru
        _
      %p219 = scmp.le.s32.totalorder 1, %s14
      %p220 = scmp.lt.s32.totalorder %s14, 3
      %p221 = pnand %p219, %p220
      %p222 = pneg %p221
      // Predicated region
      $region37: #{l2dst_forward.1} parent=5 // pred_check
        _
      $region38: #{l2dst_forward.1} parent=5 // pred_check_branch
        %224 = sbr.rel (%p221) target = $region40
      $region39: #{l2dst_forward.1} parent=5 // pred_region
        %s225 = ssub.s32 %s14, 1
        %p226 = scmp.lt.s32.totalorder %s24, 1
        %s227 = scalar_select %p226, %s24, 1
        %s228 = smul.addr %s227, 8
        %s229 = scalar_lea.vmem %s0, %s228
        %p230 = pneg %p52
        %p231 = pneg %p49
        %p232 = scmp.lt.s32.totalorder %s23, 0
        %s233 = scalar_select %p232, %s23, 0
        %s234 = smul.addr %s233, 8
        %s235 = scalar_lea.vmem %s1, %s234
        %p236 = pneg %p78
        %p237 = pneg %p75
        %p238 = scmp.lt.s32.totalorder %s23, 0
        %s239 = scalar_select %p238, %s23, 0
        %s240 = scalar_lea.vmem %s2, %s239
        %p241 = pneg %p104
        %p242 = pneg %p101
        %p243 = pneg %p125
        %p244 = pneg %p122
        %p245 = pneg %p146
        %p246 = pneg %p143
        %p247 = pneg %p174
        %p248 = pneg %p171
        %s249 = sand.u32 %s161, 1
        %s250 = scalar_lea.sflag [#allocation3], %s249
        %s251 = sand.u32 %s161, 1
        %s252 = smul.addr %s251, 16
        %s253 = scalar_lea.vmem [#allocation2], %s252
        %p254 = scmp.lt.s32.totalorder %s24, 1
        %s255 = scalar_select %p254, %s24, 1
        %s256 = smul.addr %s255, 8
        %s257 = scalar_lea.vmem %s0, %s256
        %p258 = scmp.lt.s32.totalorder %s23, 0
        %s259 = scalar_select %p258, %s23, 0
        %s260 = smul.addr %s259, 8
        %s261 = scalar_lea.vmem %s1, %s260
        %p262 = scmp.lt.s32.totalorder %s23, 0
        %s263 = scalar_select %p262, %s23, 0
        %s264 = scalar_lea.vmem %s2, %s263
        %v265 = vld [vmem:[%s257] sm:$0xff]
        %v266 = vld [vmem:[%s261] sm:$0xff]
        %v267 = vld [vmem:[%s261 + $0x8] sm:$0xff]
        %v268 = vld [vmem:[%s261 + $0x10] sm:$0xff]
        %v269 = vld [vmem:[%s261 + $0x18] sm:$0xff]
        %v270 = vld [vmem:[%s264] sm:$0x1]
        %v272 = vperm.slane %v270, 0
        %vm274 = vcmask 261120
        %v276 = vsel %vm274, %v265, 0
        %278 = vmatpush.msra.mxu0 0.0
        %279 = vmatpush.msra.mxu0 0.0
        %280 = vmatpush.msra.mxu0 0.0
        %281 = vmatpush.msra.mxu0 0.0
        %282 = vmatpush.msra.mxu0 0.0
        %283 = vmatpush.msra.mxu0 0.0
        %284 = vmatpush.msra.mxu0 0.0
        %285 = vmatpush.msra.mxu0 0.0
        %286 = vmatpush.msra.mxu0 0.0
        %287 = vmatpush.msra.mxu0 0.0
        %288 = vmatpush.msra.mxu0 0.0
        %289 = vmatpush.msra.mxu0 0.0
        %290 = vmatpush.msra.mxu0 %v269
        %291 = vmatpush.msra.mxu0 %v268
        %292 = vmatpush.msra.mxu0 %v267
        %293 = vmatpush.msra.mxu0 %v266
        %294 = vmatmul.f32.gmra.mxu0 %v276
        %v295 = vpop.f32.mrf.mxu0
        %v296 = vadd.f32 %v272, %v295
        %297 = vdwg.mxu0
        %v298 = vtanh.pop %v296
        %v299 = vld [vmem:[%s3] sm:$0xff]
        %v300 = vld [vmem:[%s3 + $0x8] sm:$0xff]
        %v301 = vld [vmem:[%s4] sm:$0xff]
        %v302 = vld [vmem:[%s4 + $0x8] sm:$0xff]
        %304 = vset.pattern.permute.xlu0 0
        %305 = vperm.xlu0 %304, %v301
        %v306 = vpop.permute.xlu0 %305
        %309 = vset.pattern.permute.xlu0 0
        %310 = vperm.xlu0 %309, %v302
        %v311 = vpop.permute.xlu0 %310
        %vm313 = vcmask 64512
        %v315 = vsel %vm313, %v299, 0
        %v318 = vsel %vm313, %v300, 0
        %320 = vmatpush.msra.mxu0 0.0
        %321 = vmatpush.msra.mxu0 0.0
        %322 = vmatpush.msra.mxu0 0.0
        %323 = vmatpush.msra.mxu0 0.0
        %324 = vmatpush.msra.mxu0 0.0
        %325 = vmatpush.msra.mxu0 0.0
        %326 = vmatpush.msra.mxu0 0.0
        %327 = vmatpush.msra.mxu0 0.0
        %328 = vmatpush.msra.mxu0 0.0
        %329 = vmatpush.msra.mxu0 0.0
        %330 = vmatpush.msra.mxu0 0.0
        %331 = vmatpush.msra.mxu0 0.0
        %332 = vmatpush.msra.mxu0 0.0
        %333 = vmatpush.msra.mxu0 0.0
        %334 = vmatpush.msra.mxu0 0.0
        %335 = vmatpush.msra.mxu0 %v298
        %336 = vmatmul.f32.gmra.mxu0 %v315
        %v337 = vpop.f32.mrf.mxu0
        %v338 = vadd.f32 %v306, %v337
        %339 = vmatmul.f32.gmra.mxu0 %v318
        %v340 = vpop.f32.mrf.mxu0
        %v341 = vadd.f32 %v311, %v340
        %342 = vdwg.mxu0
        %v343 = vtanh.pop %v338
        %v344 = vtanh.pop %v341
        %345 = vst [vmem:[%s253] sm:$0xff] %v343
        %346 = vst [vmem:[%s253 + $0x8] sm:$0xff] %v344
        %s347 = sand.u32 %s161, 1
        %s348 = scalar_lea.sflag [#allocation3], %s347
        %s349 = sand.u32 %s161, 1
        %s350 = smul.addr %s349, 16
        %s351 = scalar_lea.vmem [#allocation2], %s350
        // Predicated region
        $region41: #{l2dst_forward.1} parent=39 // pred_check
          %p352 = pneg %p171
        $region42: #{l2dst_forward.1} parent=39 // pred_check_branch
          %354 = sbr.rel (%p352) target = $region44
        $region43: #{l2dst_forward.1} parent=39 // pred_region
          %356 = vsyncadd %s348, 0
          %s357 = smul.addr %s24, 2
          %s358 = sadd.s32 %s23, %s357
          %s359 = smul.addr %s358, 8
          %s360 = scalar_lea.hbm %s5, %s359
          %s361 = sshll.u32 %s351, 4
          %s362 = int_to_ptr.vmem [resolvable:$true] %s361
          %s363 = sshll.u32 %s360, 4
          %s364 = int_to_ptr.hbm [resolvable:$true] %s363
          %369 = dma.vmem_to_hbm [thread:$0]  %s362, 256, %s364, %s348, 128, 128, 8
        $region44: #{l2dst_forward.1} parent=39 // pred_fallthru
          _
      $region40: #{l2dst_forward.1} parent=5 // pred_fallthru
        _
      %p370 = scmp.le.s32.totalorder 2, %s14
      // Predicated region
      $region45: #{l2dst_forward.1} parent=5 // pred_check
        %p371 = pneg %p370
      $region46: #{l2dst_forward.1} parent=5 // pred_check_branch
        %373 = sbr.rel (%p371) target = $region48
      $region47: #{l2dst_forward.1} parent=5 // pred_region
        %s374 = ssub.s32 %s14, 2
        // Predicated region
        $region49: #{l2dst_forward.1} parent=47 // pred_check
          %p375 = pneg %p177
        $region50: #{l2dst_forward.1} parent=47 // pred_check_branch
          %377 = sbr.rel (%p375) target = $region52
        $region51: #{l2dst_forward.1} parent=47 // pred_region
          %s378 = sand.u32 %s162, 1
          %s379 = scalar_lea.sflag [#allocation3], %s378
          %s380 = sand.u32 %s162, 1
          %s381 = smul.addr %s380, 16
          %s382 = scalar_lea.vmem [#allocation2], %s381
          %384 = dma.done %s379, 256
        $region52: #{l2dst_forward.1} parent=47 // pred_fallthru
          _
      $region48: #{l2dst_forward.1} parent=5 // pred_fallthru
        _
    $region6: #{l2dst_forward.1} parent=1 // loop_footer
      %s18 = sadd.s32 1, %s14
    $region7: #{l2dst_forward.1} parent=1 // loop_footer_branch
      %13 = sbr.rel target = $region3
    $region8: #{l2dst_forward.1} parent=1 // loop_exit
      _
    %385 = vsyncpa [#allocation3], 1
    %s386 = scalar_lea.sflag [#allocation3], 1
    %387 = vsyncpa %s386, 1

</llo_original>
